<compile_context>
chip_gen: v5e
topology: v5e:2x2
jax: 0.10.0
libtpu: 0.0.40
codegen_flags: <defaults>
</compile_context>

<pallas_src>
import functools

import jax
import jax.numpy as jnp
from jax.experimental import pallas as pl
from jax.experimental.pallas import tpu as pltpu

EPS = 1e-6


def _round_up(n, m):
    return ((n + m - 1) // m) * m


def _vmem_capacity_bytes(default=64 * 1024 * 1024):
    """Capability probe only (never changes semantics).

    Default is the smallest (v7x, 64 MiB) so a failed probe can only make the
    tiling more conservative, never incorrect.
    """
    try:
        return int(pltpu.get_tpu_info().vmem_capacity_bytes)
    except Exception:  # older jax without get_tpu_info / non-TPU trace host
        return default


def _supports_pipeline_mode():
    """Explicit feature check for BlockSpec(pipeline_mode=pl.Buffered(n))."""
    if not hasattr(pl, "Buffered"):
        return False
    try:
        pl.BlockSpec((8, 128), lambda i: (i, 0), pipeline_mode=pl.Buffered(2))
        return True
    except TypeError:
        return False


def sublayer_connection_kernel(x_ref, w_ref, b_ref, o_ref, *, hidden, eps):
    """One (row-tile, col-tile) grid step.

    x_ref: (TM, Hp)  input rows, lane-padded to a multiple of 128.
    w_ref: (Hp, TN)  bf16 fused weight (LN affine folded in, padded rows/cols = 0).
    b_ref: (1, TN)   f32 fused bias.
    o_ref: (TM, TN)  output tile = x[:, n-slice] + Linear(LayerNorm(x))[:, n-slice].
    """
    hp = x_ref.shape[1]      # static padded lane width
    tn = w_ref.shape[1]      # static output-column tile width

    x = x_ref[...].astype(jnp.float32)

    # --- LayerNorm statistics: centered two-pass (torch: unbiased std) -------
    mean = jnp.sum(x, axis=-1, keepdims=True) * (1.0 / hidden)
    centered = x - mean
    if hp != hidden:
        # Padded lanes hold zeros in x; mask them so they do not pollute the
        # variance (the mean is already correct since zeros contribute 0).
        lane = jax.lax.broadcasted_iota(jnp.int32, x.shape, 1)
        centered = jnp.where(lane < hidden, centered, 0.0)
    var = jnp.sum(centered * centered, axis=-1, keepdims=True) * (1.0 / (hidden - 1))
    inv = pl.reciprocal(jnp.sqrt(var) + eps, approx=True)   # EUP slot, ~free
    normed = centered * inv     # a_2 / b_2 already folded into w_ref / b_ref

    # --- sublayer: Linear on the MXU, bf16 x bf16 -> f32, full-Hp K dim ------
    y = jnp.dot(normed.astype(w_ref.dtype), w_ref[...],
                preferred_element_type=jnp.float32) + b_ref[...]

    # --- dropout (eval mode = identity) + residual add over this N-slice -----
    # TODO(synk): training-mode dropout via pltpu.prng_random_bits if needed.
    if tn == hp:
        x_res = x
    else:
        n0 = pl.multiple_of(pl.program_id(1) * tn, tn)
        x_res = x_ref[:, pl.ds(n0, tn)].astype(jnp.float32)
    o_ref[...] = (x_res + y).astype(o_ref.dtype)


def sublayer_connection(x, a2, b2, w_sub, b_sub, *,
                        tile_rows=512, vmem_budget_bytes=None, eps=EPS):
    """x: (B, S, H).  a2/b2: (H,) LayerNorm affine.  w_sub: (H, H), b_sub: (H,).

    Call under jax.jit so the host-side weight fold is constant-folded once.
    """
    B, S, H = x.shape
    rows = B * S
    out_dtype = x.dtype

    # ---- host-side precompute: fold LN affine into the linear sublayer ------
    w_f32 = w_sub.astype(jnp.float32)
    w_fused = (a2.astype(jnp.float32)[:, None] * w_f32).astype(jnp.bfloat16)
    b_fused = (b2.astype(jnp.float32) @ w_f32
               + b_sub.astype(jnp.float32)).reshape(1, H)

    # ---- lane-dense padding of H to a multiple of 128 ------------------------
    hp = _round_up(H, 128)
    x2d = x.reshape(rows, H)
    if hp != H:
        x2d = jnp.pad(x2d, ((0, 0), (0, hp - H)))
        w_fused = jnp.pad(w_fused, ((0, hp - H), (0, hp - H)))
        b_fused = jnp.pad(b_fused, ((0, 0), (0, hp - H)))

    # ---- generation-aware VMEM budgeting -------------------------------------
    cap = _vmem_capacity_bytes()
    budget = int(cap * 0.75) if vmem_budget_bytes is None else int(vmem_budget_bytes)
    has_pipe = _supports_pipeline_mode()

    # Weight placement: keep the full (hp, hp) bf16 weight resident
    # (single-buffered when supported); otherwise split along output-N with
    # divisor column tiles so every block tiles hp exactly (no OOB slices).
    w_bufs_resident = 1 if has_pipe else 2
    if w_bufs_resident * hp * hp * 2 <= budget // 2:
        tn = hp
        w_bufs = w_bufs_resident
    else:
        m = hp // 128
        best_t = 1
        for t in range(1, m + 1):
            if m % t == 0 and 2 * hp * (128 * t) * 2 <= budget // 2:
                best_t = t
        tn = 128 * best_t
        w_bufs = 2

    x_item = jnp.dtype(x.dtype).itemsize
    o_item = jnp.dtype(out_dtype).itemsize
    # Deeper input buffering only on 128 MiB parts (v5e/v6e); keep 2 on v7x.
    x_bufs = 3 if (has_pipe and cap >= 96 * 1024 * 1024) else 2

    fixed_bytes = w_bufs * hp * tn * 2 + 2 * tn * 4               # weight + bias
    per_row = x_bufs * hp * x_item + 2 * tn * o_item + 12 * hp + 4 * tn

    # Largest row tile within budget (default 512; only shrink when forced).
    # On v5e (MXU-bound for large H) 512 is already within the recommended cap.
    tm = max(8, min(_round_up(tile_rows, 8), _round_up(rows, 8)))
    while tm > 8 and fixed_bytes + tm * per_row > budget:
        tm = max(8, (tm // 2) // 8 * 8)

    # Balance the row grid for v7x's two TensorCores (even tile count).
    n_row_tiles = pl.cdiv(rows, tm)
    if n_row_tiles > 1 and n_row_tiles % 2 == 1:
        tm = max(8, _round_up(pl.cdiv(rows, n_row_tiles + 1), 8))
        n_row_tiles = pl.cdiv(rows, tm)
    n_col_tiles = hp // tn

    vmem_limit = min(cap, max(32 * 1024 * 1024,
                              fixed_bytes + tm * per_row + (4 << 20)))

    kernel = functools.partial(sublayer_connection_kernel, hidden=H, eps=eps)

    def spec(shape, index_map, bufs=None):
        if bufs is not None and has_pipe:
            return pl.BlockSpec(shape, index_map, pipeline_mode=pl.Buffered(bufs))
        return pl.BlockSpec(shape, index_map)

    grid_spec = pltpu.PrefetchScalarGridSpec(
        num_scalar_prefetch=0,
        grid=(n_row_tiles, n_col_tiles),
        in_specs=[
            # streamed rows (kept resident across the inner N axis)
            spec((tm, hp), lambda i, j: (i, 0), bufs=x_bufs),
            # fused weight: resident (Buffered(1)) when tn == hp, else streamed
            spec((hp, tn), lambda i, j: (0, j),
                 bufs=(1 if tn == hp else None)),
            # fused bias
            spec((1, tn), lambda i, j: (0, j),
                 bufs=(1 if tn == hp else None)),
        ],
        out_specs=pl.BlockSpec((tm, tn), lambda i, j: (i, j)),
    )

    out2d = pl.pallas_call(
        kernel,
        out_shape=jax.ShapeDtypeStruct((rows, hp), out_dtype),
        grid_spec=grid_spec,
        compiler_params=pltpu.CompilerParams(
            # "parallel" rows lets v7x shard the row grid across its 2 TCs;
            # the N axis is inner/"arbitrary" so x stays resident across it.
            dimension_semantics=("parallel", "arbitrary"),
            vmem_limit_bytes=int(vmem_limit)),
    )(x2d, w_fused, b_fused)

    if hp != H:
        out2d = out2d[:, :H]
    return out2d.reshape(B, S, H)


def reference(x, a2, b2, w_sub, b_sub):
    xf = x.astype(jnp.float32)
    mean = jnp.mean(xf, axis=-1, keepdims=True)
    centered = xf - mean
    var = jnp.sum(centered * centered, axis=-1, keepdims=True) / (x.shape[-1] - 1)
    std = jnp.sqrt(var)
    normed = a2 * centered / (std + EPS) + b2
    y = normed @ w_sub.astype(jnp.float32) + b_sub
    return (xf + y).astype(x.dtype)


if __name__ == "__main__":
    B, S, H = 2, 8, 32  # small demo shape; rows = 16, H padded to 128 in-kernel

    key = jax.random.PRNGKey(0)
    kx, kw, kb, ka2, kb2 = jax.random.split(key, 5)

    x = jax.random.normal(kx, (B, S, H), dtype=jnp.float32)

    # LayerNorm affine params (init is ones/zeros; perturbed to exercise the fold).
    a2 = 1.0 + 0.1 * jax.random.normal(ka2, (H,), dtype=jnp.float32)
    b2 = 0.1 * jax.random.normal(kb2, (H,), dtype=jnp.float32)

    # Deterministic synthetic sublayer (Linear(H, H)).
    w_sub = jax.random.normal(kw, (H, H), dtype=jnp.float32) * 0.02
    b_sub = jax.random.normal(kb, (H,), dtype=jnp.float32) * 0.02

    # jit so the LN-affine -> weight fold is constant-folded once per shape.
    fused_fwd = jax.jit(sublayer_connection)
    out = jax.block_until_ready(fused_fwd(x, a2, b2, w_sub, b_sub))

    ref = reference(x, a2, b2, w_sub, b_sub)
    assert out.shape == x.shape
    # bf16 MXU weights + approx reciprocal -> bf16-appropriate tolerances.
    assert jnp.allclose(out, ref, atol=3e-2, rtol=3e-2), "mismatch vs reference"

    print("KERNEL_OK")
</pallas_src>

<mosaic_0001>
module attributes {stable_mosaic.version = 11 : i64} {
  func.func @sublayer_connection_kernel(%arg0: i32, %arg1: i32, %arg2: memref<16x128xf32, #tpu.memory_space<vmem>>, %arg3: memref<128x128xbf16, #tpu.memory_space<vmem>>, %arg4: memref<1x128xf32, #tpu.memory_space<vmem>>, %arg5: memref<16x128xf32, #tpu.memory_space<vmem>>) attributes {dimension_semantics = [#tpu.dimension_semantics<parallel>, #tpu.dimension_semantics<arbitrary>], iteration_bounds = array<i64: 1, 1>, scalar_prefetch = 0 : i64, scratch_operands = 0 : i64, tpu.core_type = #tpu.core_type<tc>, window_params = [{pipeline_mode = #tpu.pipeline_mode<double_buffered>, transform_indices = @transform_0, window_bounds = array<i64: 16, 128>}, {pipeline_mode = #tpu.pipeline_mode<synchronous>, transform_indices = @transform_1, window_bounds = array<i64: 128, 128>}, {pipeline_mode = #tpu.pipeline_mode<synchronous>, transform_indices = @transform_2, window_bounds = array<i64: 1, 128>}, {transform_indices = @transform_3, window_bounds = array<i64: 16, 128>}]} {
    %c0 = arith.constant 0 : index
    %c0_0 = arith.constant 0 : index
    %0 = vector.load %arg2[%c0, %c0_0] : memref<16x128xf32, #tpu.memory_space<vmem>>, vector<16x128xf32>
    %cst = arith.constant dense<0.000000e+00> : vector<16xf32>
    %1 = vector.multi_reduction <add>, %0, %cst [1] : vector<16x128xf32> to vector<16xf32>
    %2 = vector.shape_cast %1 : vector<16xf32> to vector<16x1xf32>
    %cst_1 = arith.constant 3.125000e-02 : f32
    %3 = vector.broadcast %cst_1 : f32 to vector<16x1xf32>
    %4 = arith.mulf %2, %3 : vector<16x1xf32>
    %5 = vector.broadcast %4 : vector<16x1xf32> to vector<16x128xf32>
    %6 = arith.subf %0, %5 : vector<16x128xf32>
    %7 = tpu.iota {dimensions = array<i32: 1>} : vector<16x128xi32>
    %c32_i32 = arith.constant 32 : i32
    %8 = vector.broadcast %c32_i32 : i32 to vector<16x128xi32>
    %9 = arith.cmpi slt, %7, %8 : vector<16x128xi32>
    %cst_2 = arith.constant 0.000000e+00 : f32
    %10 = vector.broadcast %cst_2 : f32 to vector<16x128xf32>
    %11 = arith.select %9, %6, %10 : vector<16x128xi1>, vector<16x128xf32>
    %12 = arith.mulf %11, %11 : vector<16x128xf32>
    %cst_3 = arith.constant dense<0.000000e+00> : vector<16xf32>
    %13 = vector.multi_reduction <add>, %12, %cst_3 [1] : vector<16x128xf32> to vector<16xf32>
    %14 = vector.shape_cast %13 : vector<16xf32> to vector<16x1xf32>
    %cst_4 = arith.constant 0.0322580636 : f32
    %15 = vector.broadcast %cst_4 : f32 to vector<16x1xf32>
    %16 = arith.mulf %14, %15 : vector<16x1xf32>
    %17 = math.sqrt %16 : vector<16x1xf32>
    %cst_5 = arith.constant 9.99999997E-7 : f32
    %18 = vector.broadcast %cst_5 : f32 to vector<16x1xf32>
    %19 = arith.addf %17, %18 : vector<16x1xf32>
    %20 = tpu.reciprocal %19 {approx = true} : vector<16x1xf32> -> vector<16x1xf32>
    %21 = vector.broadcast %20 : vector<16x1xf32> to vector<16x128xf32>
    %22 = arith.mulf %11, %21 : vector<16x128xf32>
    %23 = arith.truncf %22 : vector<16x128xf32> to vector<16x128xbf16>
    %c0_6 = arith.constant 0 : index
    %c0_7 = arith.constant 0 : index
    %24 = vector.load %arg3[%c0_6, %c0_7] : memref<128x128xbf16, #tpu.memory_space<vmem>>, vector<128x128xbf16>
    %cst_8 = arith.constant dense<0.000000e+00> : vector<16x128xf32>
    %25 = tpu.matmul %23, %24, %cst_8 {dimension_numbers = #tpu.dot_dimension_numbers<[1], [0], [0], [1], [0, 0, 1, 1], [], []>} : vector<16x128xbf16>, vector<128x128xbf16>, vector<16x128xf32> -> vector<16x128xf32>
    %c0_9 = arith.constant 0 : index
    %c0_10 = arith.constant 0 : index
    %26 = vector.load %arg4[%c0_9, %c0_10] : memref<1x128xf32, #tpu.memory_space<vmem>>, vector<1x128xf32>
    %27 = vector.broadcast %26 : vector<1x128xf32> to vector<16x128xf32>
    %28 = arith.addf %25, %27 : vector<16x128xf32>
    %29 = arith.addf %0, %28 : vector<16x128xf32>
    %c0_11 = arith.constant 0 : index
    %c0_12 = arith.constant 0 : index
    %30 = vector.load %arg5[%c0_11, %c0_12] : memref<16x128xf32, #tpu.memory_space<vmem>>, vector<16x128xf32>
    tpu.vector_store %arg5[%c0_11, %c0_12], %29 {strides = array<i32>} : memref<16x128xf32, #tpu.memory_space<vmem>>, vector<16x128xf32>,
    return
  }
  func.func @transform_0(%arg0: i32, %arg1: i32) -> (i32, i32) {
    %c0_i32 = arith.constant 0 : i32
    %c0_i32_0 = arith.constant 0 : i32
    return %arg0, %c0_i32 : i32, i32
  }
  func.func @transform_1(%arg0: i32, %arg1: i32) -> (i32, i32) {
    %c0_i32 = arith.constant 0 : i32
    %c0_i32_0 = arith.constant 0 : i32
    return %c0_i32, %arg1 : i32, i32
  }
  func.func @transform_2(%arg0: i32, %arg1: i32) -> (i32, i32) {
    %c0_i32 = arith.constant 0 : i32
    %c0_i32_0 = arith.constant 0 : i32
    return %c0_i32, %arg1 : i32, i32
  }
  func.func @transform_3(%arg0: i32, %arg1: i32) -> (i32, i32) {
    %c0_i32 = arith.constant 0 : i32
    return %arg0, %arg1 : i32, i32
  }
}

</mosaic_0001>

<llo_original>
// kernel: sublayer_connection.1
$region0: #{sublayer_connection.1}
  #allocation0 [shape = 'u32[]', space=smem, size = 0x4, offset = 0x4, fixed_abs, tag = 'smem constant byte address 0x4 - core index']
  #allocation1 [shape = 'u32[72,128]{1,0:T(1,128)}', space=vmem, size = 0x9000, scoped, tag = 'internal scratch']
  %s0 = inlined_call_operand.vmem [shape: f32[16,128], index: 0, kind: input, shape index: {}]
  %s1 = inlined_call_operand.vmem [shape: bf16[128,128], index: 1, kind: input, shape index: {}]
  %s2 = inlined_call_operand.vmem [shape: f32[1,128], index: 2, kind: input, shape index: {}]
  %s3 = inlined_call_operand.vmem [shape: f32[16,128], index: 3, kind: output, shape index: {}]
  %s4 = sld [smem:[#allocation0]]
  $region22: #{sublayer_connection.1} parent=0
    _
  %s6 = ssub.s32 1, %s4
  %s7 = scalar_select 0, %s6, %s4
  // Predicated region
  $region2: #{sublayer_connection.1} parent=0 // pred_check
    _
  $region3: #{sublayer_connection.1} parent=0 // pred_check_branch
    %9 = sbr.rel (0) target = $region5
  $region4: #{sublayer_connection.1} parent=0 // pred_region
    _
  $region5: #{sublayer_connection.1} parent=0 // pred_fallthru
    _
  // Predicated region
  $region6: #{sublayer_connection.1} parent=0 // pred_check
    _
  $region7: #{sublayer_connection.1} parent=0 // pred_check_branch
    %11 = sbr.rel (0) target = $region9
  $region8: #{sublayer_connection.1} parent=0 // pred_region
    _
  $region9: #{sublayer_connection.1} parent=0 // pred_fallthru
    _
  // Predicated region
  $region10: #{sublayer_connection.1} parent=0 // pred_check
    _
  $region11: #{sublayer_connection.1} parent=0 // pred_check_branch
    %13 = sbr.rel (0) target = $region13
  $region12: #{sublayer_connection.1} parent=0 // pred_region
    _
  $region13: #{sublayer_connection.1} parent=0 // pred_fallthru
    _
  %v14 = vld [vmem:[%s0] sm:$0xff]
  %v15 = vld [vmem:[%s0 + $0x8] sm:$0xff]
  %16 = vadd.xlane.f32.xlu0 %v14
  %v17 = vpop.xlane.xlu0 %16
  %18 = vadd.xlane.f32.xlu0 %v15
  %v19 = vpop.xlane.xlu0 %18
  %v20 = vmul.f32 %v17, 0.03125
  %v21 = vmul.f32 %v19, 0.03125
  %v22 = vsub.f32 %v14, %v20
  %v23 = vsub.f32 %v15, %v21
  %v24 = vlaneseq
  %v25 = vand.u32 %v24, 127
  %vm26 = vcmp.lt.s32.totalorder %v25, 32
  %v27 = vsel %vm26, %v22, 0.0
  %v28 = vsel %vm26, %v23, 0.0
  %v29 = vmul.f32 %v27, %v27
  %v30 = vmul.f32 %v28, %v28
  %31 = vadd.xlane.f32.xlu0 %v29
  %v32 = vpop.xlane.xlu0 %31
  %33 = vadd.xlane.f32.xlu0 %v30
  %v34 = vpop.xlane.xlu0 %33
  %v35 = vmul.f32 %v32, 0.032258064
  %v36 = vmul.f32 %v34, 0.032258064
  %v37 = vrsqrt.pop %v35
  %v38 = vmul.f32 %v37, %v35
  %v39 = vmul.f32 %v38, %v37
  %v40 = vmul.f32 0.5, %v39
  %v41 = vsub.f32 1.5, %v40
  %v42 = vmul.f32 %v37, %v41
  %v43 = vmul.f32 %v35, %v42
  %vm44 = vcmp.eq.f32.partialorder %v35, inf
  %v45 = vsel %vm44, %v35, %v43
  %vm46 = vcmp.eq.f32.partialorder %v35, 0.0
  %v47 = vand.u32 %v35, 2147483648
  %v48 = vsel %vm46, %v47, %v45
  %v49 = vrsqrt.pop %v36
  %v50 = vmul.f32 %v49, %v36
  %v51 = vmul.f32 %v50, %v49
  %v52 = vmul.f32 0.5, %v51
  %v53 = vsub.f32 1.5, %v52
  %v54 = vmul.f32 %v49, %v53
  %v55 = vmul.f32 %v36, %v54
  %vm56 = vcmp.eq.f32.partialorder %v36, inf
  %v57 = vsel %vm56, %v36, %v55
  %vm58 = vcmp.eq.f32.partialorder %v36, 0.0
  %v59 = vand.u32 %v36, 2147483648
  %v60 = vsel %vm58, %v59, %v57
  %v61 = vadd.f32 %v48, 1e-06
  %v62 = vadd.f32 %v60, 1e-06
  %v63 = vrcp.pop %v61
  %v64 = vrcp.pop %v62
  %v65 = vmul.f32 %v27, %v63
  %v66 = vmul.f32 %v28, %v64
  %v67 = vpack.c.bf16 %v66, %v65
  %v68 = vld [vmem:[%s1] sm:$0xf]
  %v69 = vld [vmem:[%s1 + $0x4] sm:$0xf]
  %v70 = vld [vmem:[%s1 + $0x8] sm:$0xf]
  %v71 = vld [vmem:[%s1 + $0xc] sm:$0xf]
  %v72 = vld [vmem:[%s1 + $0x10] sm:$0xf]
  %v73 = vld [vmem:[%s1 + $0x14] sm:$0xf]
  %v74 = vld [vmem:[%s1 + $0x18] sm:$0xf]
  %v75 = vld [vmem:[%s1 + $0x1c] sm:$0xf]
  %v76 = vld [vmem:[%s1 + $0x20] sm:$0xf]
  %v77 = vld [vmem:[%s1 + $0x24] sm:$0xf]
  %v78 = vld [vmem:[%s1 + $0x28] sm:$0xf]
  %v79 = vld [vmem:[%s1 + $0x2c] sm:$0xf]
  %v80 = vld [vmem:[%s1 + $0x30] sm:$0xf]
  %v81 = vld [vmem:[%s1 + $0x34] sm:$0xf]
  %v82 = vld [vmem:[%s1 + $0x38] sm:$0xf]
  %v83 = vld [vmem:[%s1 + $0x3c] sm:$0xf]
  %v84 = vld [vmem:[%s2] sm:$0x1]
  %v86 = vperm.slane %v84, 0
  %v104 = vunpack.c.l.b16 %v68
  %v105 = vunpack.c.l.b16 %v69
  %v106 = vunpack.c.l.b16 %v70
  %v107 = vunpack.c.l.b16 %v71
  %v108 = vunpack.c.l.b16 %v72
  %v109 = vunpack.c.l.b16 %v73
  %v110 = vunpack.c.l.b16 %v74
  %v111 = vunpack.c.l.b16 %v75
  %v112 = vunpack.c.l.b16 %v76
  %v113 = vunpack.c.l.b16 %v77
  %v114 = vunpack.c.l.b16 %v78
  %v115 = vunpack.c.l.b16 %v79
  %v116 = vunpack.c.l.b16 %v80
  %v117 = vunpack.c.l.b16 %v81
  %v118 = vunpack.c.l.b16 %v82
  %v119 = vunpack.c.l.b16 %v83
  %v120 = vpack.c.b16 %v105, %v104
  %v121 = vpack.c.b16 %v107, %v106
  %v122 = vpack.c.b16 %v109, %v108
  %v123 = vpack.c.b16 %v111, %v110
  %v124 = vpack.c.b16 %v113, %v112
  %v125 = vpack.c.b16 %v115, %v114
  %v126 = vpack.c.b16 %v117, %v116
  %v127 = vpack.c.b16 %v119, %v118
  %136 = vmatpush.bf16.msra.mxu0 %v127
  %137 = vmatpush.bf16.msra.mxu0 %v126
  %138 = vmatpush.bf16.msra.mxu0 %v125
  %139 = vmatpush.bf16.msra.mxu0 %v124
  %140 = vmatpush.bf16.msra.mxu0 %v123
  %141 = vmatpush.bf16.msra.mxu0 %v122
  %142 = vmatpush.bf16.msra.mxu0 %v121
  %143 = vmatpush.bf16.msra.mxu0 %v120
  %144 = vmatmul.bf16.gmra.mxu0 %v67
  %v145 = vpop.f32.mrf.mxu0
  %v146 = vadd.f32 %v86, %v145
  %v147 = vpop.f32.mrf.mxu0
  %v148 = vadd.f32 %v86, %v147
  %149 = vdwg.mxu0
  %v150 = vadd.f32 %v14, %v146
  %v151 = vadd.f32 %v15, %v148
  %152 = vst [vmem:[%s3] sm:$0xff] %v150
  %153 = vst [vmem:[%s3 + $0x8] sm:$0xff] %v151
  // Predicated region
  $region14: #{sublayer_connection.1} parent=0 // pred_check
    _
  $region15: #{sublayer_connection.1} parent=0 // pred_check_branch
    %155 = sbr.rel (0) target = $region17
  $region16: #{sublayer_connection.1} parent=0 // pred_region
    _
  $region17: #{sublayer_connection.1} parent=0 // pred_fallthru
    _
  // Predicated region
  $region18: #{sublayer_connection.1} parent=0 // pred_check
    _
  $region19: #{sublayer_connection.1} parent=0 // pred_check_branch
    %157 = sbr.rel (0) target = $region21
  $region20: #{sublayer_connection.1} parent=0 // pred_region
    _
  $region21: #{sublayer_connection.1} parent=0 // pred_fallthru
    _

</llo_original>
